<compile_context>
chip_gen: v7x
topology: tpu7x:2x2x1
jax: 0.10.0
libtpu: 0.0.40
codegen_flags: <defaults>
</compile_context>

<pallas_src>
import jax
import jax.numpy as jnp
from jax.experimental import pallas as pl
from jax.experimental.pallas import tpu as pltpu


def _graphconv_kernel(x_ref, a_ref, w_ref, b_ref, o_ref, y_ref):
    """One grid step = one (n, t-tile, o) triple.

    x_ref: (1, C, TBt, V)   input tile, native NCTV layout
    a_ref: (V, V)           adjacency, VMEM resident (same dtype as x)
    w_ref: (O, C) f32       1x1-conv weight in SMEM (scalar reads)
    b_ref: (O,)   f32       bias in SMEM
    o_ref: (1, 1, TBt, V)   output tile, NCHW layout, dtype = out_dtype
    y_ref: (C, TBt, V) f32  VMEM scratch: stage-1 (vertex-mixed) activations,
                            computed at o == 0 and reused across the O sweep.
    """
    o = pl.program_id(2)
    C = y_ref.shape[0]

    # Stage 1 (MXU, f32 accumulation): y[c] = x[n, c, t-tile, :] @ A.
    # Computed only once per (n, t-tile); reused for every output channel.
    @pl.when(o == 0)
    def _():
        a = a_ref[...]
        for c in range(C):                       # static unroll, C is small
            y_ref[c] = jnp.dot(x_ref[0, c], a,
                               preferred_element_type=jnp.float32)

    # Stage 2 (VPU, f32): out[o] = b[o] + sum_c W[o, c] * y[c].
    acc = jnp.zeros(y_ref.shape[1:], dtype=jnp.float32)
    for c in range(C):                           # static unroll
        acc = acc + w_ref[o, c] * y_ref[c]
    o_ref[0, 0] = (acc + b_ref[o]).astype(o_ref.dtype)


def graph_conv(x, A, W, b, *, t_tile=128, out_dtype=jnp.float32):
    """STGCN GraphConv forward: Conv2d(C->O, 1x1)(einsum('nctv,vw->nctw', x, A)).

    x: (N, C, T, V); A: (V, V); W: (O, C) squeezed 1x1-conv weight; b: (O,).
    Returns (N, O, T, V) in `out_dtype` (PyTorch NCHW layout); f32 accumulation.
    """
    N, C, T, V = x.shape
    O = W.shape[0]

    def _round8(v):
        return ((v + 7) // 8) * 8

    # Time tile: sublane-aligned; pad T if needed and slice it off afterwards.
    TBt = min(_round8(t_tile), _round8(T))
    T_pad = ((T + TBt - 1) // TBt) * TBt
    if T_pad != T:
        x = jnp.pad(x, ((0, 0), (0, 0), (0, T_pad - T), (0, 0)))

    grid = (N, T_pad // TBt, O)

    A = A.astype(x.dtype)                 # stage-1 MXU operands share x's dtype
    W32 = W.astype(jnp.float32)           # stage-2 stays full f32
    b32 = b.astype(jnp.float32)

    x_isz = jnp.dtype(x.dtype).itemsize
    o_isz = jnp.dtype(out_dtype).itemsize
    est_vmem = (2 * C * TBt * V * x_isz   # double-buffered x tile
                + 2 * TBt * V * o_isz     # double-buffered output tile
                + 2 * V * V * x_isz       # resident adjacency (tiny)
                + C * TBt * V * 4)        # stage-1 f32 scratch
    vmem_limit = int(min(64 * 1024 * 1024, max(8 * 1024 * 1024, 3 * est_vmem)))

    out = pl.pallas_call(
        _graphconv_kernel,
        out_shape=jax.ShapeDtypeStruct((N, O, T_pad, V), out_dtype),
        grid_spec=pltpu.PrefetchScalarGridSpec(
            num_scalar_prefetch=0,
            grid=grid,
            in_specs=[
                # x in native NCTV layout: no XLA-side transpose of the input.
                pl.BlockSpec((1, C, TBt, V), lambda n, t, o: (n, 0, t, 0)),
                # Adjacency: resident (constant index -> fetched once; only ~V*V
                # bytes, so the old Buffered(1)/residency concern no longer applies).
                pl.BlockSpec((V, V), lambda n, t, o: (0, 0)),
                # 1x1-conv weight + bias: whole arrays in SMEM (scalar reads).
                pl.BlockSpec(memory_space=pltpu.MemorySpace.SMEM),
                pl.BlockSpec(memory_space=pltpu.MemorySpace.SMEM),
            ],
            # Output written directly in NCHW (N, O, T, V): no back-transpose.
            out_specs=pl.BlockSpec((1, 1, TBt, V), lambda n, t, o: (n, o, t, 0)),
            scratch_shapes=[pltpu.VMEM((C, TBt, V), jnp.float32)],
        ),
        compiler_params=pltpu.CompilerParams(
            dimension_semantics=("parallel", "parallel", "arbitrary"),
            vmem_limit_bytes=vmem_limit,
        ),
    )(x, A, W32, b32)

    if T_pad != T:
        out = out[:, :, :T, :]
    return out


if __name__ == "__main__":
    # Small shapes consistent with the module: batch=2, in_ch=4, T=8, V=16, out_ch=8.
    N, C, T, V, O = 2, 4, 8, 16, 8

    key = jax.random.PRNGKey(0)
    kx, ka, kw, kb = jax.random.split(key, 4)

    x = jax.random.normal(kx, (N, C, T, V), dtype=jnp.float32)   # NCTV input
    A = jax.random.uniform(ka, (V, V), dtype=jnp.float32)        # fixed adjacency
    W = jax.random.normal(kw, (O, C), dtype=jnp.float32) * 0.1   # Conv2d(O,C,1,1) weight
    b = jax.random.normal(kb, (O,), dtype=jnp.float32) * 0.1     # Conv2d bias

    # Plain-JAX reference (mirrors the PyTorch forward exactly).
    y_ref = jnp.einsum('nctv,vw->nctw', x, A)
    out_ref = jnp.einsum('oc,nctw->notw', W, y_ref) + b[None, :, None, None]

    # f32 output path (tolerance leaves margin for MXU f32 matmul rounding).
    out = jax.block_until_ready(graph_conv(x, A, W, b))
    assert out.shape == (N, O, T, V)
    assert jnp.allclose(out, out_ref, atol=5e-3, rtol=5e-3)

    # bf16 output path (halves the dominant HBM write stream); f32 accumulation.
    out_bf16 = jax.block_until_ready(graph_conv(x, A, W, b, out_dtype=jnp.bfloat16))
    assert out_bf16.shape == (N, O, T, V)
    assert jnp.allclose(out_bf16.astype(jnp.float32), out_ref, atol=3e-2, rtol=3e-2)

    # T not a multiple of the time tile: exercises the padded-grid path.
    x2 = jax.random.normal(kx, (N, C, 12, V), dtype=jnp.float32)
    y2 = jnp.einsum('nctv,vw->nctw', x2, A)
    ref2 = jnp.einsum('oc,nctw->notw', W, y2) + b[None, :, None, None]
    out2 = jax.block_until_ready(graph_conv(x2, A, W, b, t_tile=8))
    assert out2.shape == (N, O, 12, V)
    assert jnp.allclose(out2, ref2, atol=5e-3, rtol=5e-3)

    print("KERNEL_OK")
</pallas_src>

<mosaic_0001>
module attributes {stable_mosaic.version = 11 : i64} {
  func.func @_graphconv_kernel(%arg0: i32, %arg1: i32, %arg2: i32, %arg3: memref<1x4x8x16xf32, #tpu.memory_space<vmem>>, %arg4: memref<16x16xf32, #tpu.memory_space<vmem>>, %arg5: memref<8x4xf32, #tpu.memory_space<smem>>, %arg6: memref<8xf32, #tpu.memory_space<smem>>, %arg7: memref<1x1x8x16xf32, #tpu.memory_space<vmem>>, %arg8: memref<4x8x16xf32, #tpu.memory_space<vmem>>) attributes {dimension_semantics = [#tpu.dimension_semantics<parallel>, #tpu.dimension_semantics<parallel>, #tpu.dimension_semantics<arbitrary>], iteration_bounds = array<i64: 2, 1, 8>, scalar_prefetch = 0 : i64, scratch_operands = 1 : i64, tpu.core_type = #tpu.core_type<tc>, window_params = [{transform_indices = @transform_0, window_bounds = array<i64: 1, 4, 8, 16>}, {pipeline_mode = #tpu.pipeline_mode<synchronous>, transform_indices = @transform_1, window_bounds = array<i64: 16, 16>}, {transform_indices = @transform_2, window_bounds = array<i64: 8, 4>}, {transform_indices = @transform_3, window_bounds = array<i64: 8>}, {transform_indices = @transform_4, window_bounds = array<i64: 1, 1, 8, 16>}]} {
    %c0_i32 = arith.constant 0 : i32
    %0 = arith.cmpi eq, %arg2, %c0_i32 : i32
    %1 = arith.extui %0 : i1 to i32
    %c0_i32_0 = arith.constant 0 : i32
    %2 = arith.cmpi ne, %1, %c0_i32_0 : i32
    scf.if %2 {
      %c0_17 = arith.constant 0 : index
      %c0_18 = arith.constant 0 : index
      %39 = vector.load %arg4[%c0_17, %c0_18] : memref<16x16xf32, #tpu.memory_space<vmem>>, vector<16x16xf32>
      %c0_19 = arith.constant 0 : index
      %c0_20 = arith.constant 0 : index
      %c0_21 = arith.constant 0 : index
      %c0_22 = arith.constant 0 : index
      %40 = vector.load %arg3[%c0_19, %c0_20, %c0_21, %c0_22] : memref<1x4x8x16xf32, #tpu.memory_space<vmem>>, vector<1x1x8x16xf32>
      %41 = vector.shape_cast %40 : vector<1x1x8x16xf32> to vector<8x16xf32>
      %cst_23 = arith.constant dense<0.000000e+00> : vector<8x16xf32>
      %42 = tpu.matmul %41, %39, %cst_23 {dimension_numbers = #tpu.dot_dimension_numbers<[1], [0], [0], [1], [0, 0, 1, 1], [], []>} : vector<8x16xf32>, vector<16x16xf32>, vector<8x16xf32> -> vector<8x16xf32>
      %c0_24 = arith.constant 0 : index
      %c0_25 = arith.constant 0 : index
      %c0_26 = arith.constant 0 : index
      %43 = vector.load %arg8[%c0_24, %c0_25, %c0_26] : memref<4x8x16xf32, #tpu.memory_space<vmem>>, vector<1x8x16xf32>
      %44 = vector.shape_cast %43 : vector<1x8x16xf32> to vector<8x16xf32>
      %45 = vector.shape_cast %42 : vector<8x16xf32> to vector<1x8x16xf32>
      tpu.vector_store %arg8[%c0_24, %c0_25, %c0_26], %45 {strides = array<i32>} : memref<4x8x16xf32, #tpu.memory_space<vmem>>, vector<1x8x16xf32>,
      %c0_27 = arith.constant 0 : index
      %c1_28 = arith.constant 1 : index
      %c0_29 = arith.constant 0 : index
      %c0_30 = arith.constant 0 : index
      %46 = vector.load %arg3[%c0_27, %c1_28, %c0_29, %c0_30] : memref<1x4x8x16xf32, #tpu.memory_space<vmem>>, vector<1x1x8x16xf32>
      %47 = vector.shape_cast %46 : vector<1x1x8x16xf32> to vector<8x16xf32>
      %cst_31 = arith.constant dense<0.000000e+00> : vector<8x16xf32>
      %48 = tpu.matmul %47, %39, %cst_31 {dimension_numbers = #tpu.dot_dimension_numbers<[1], [0], [0], [1], [0, 0, 1, 1], [], []>} : vector<8x16xf32>, vector<16x16xf32>, vector<8x16xf32> -> vector<8x16xf32>
      %c1_32 = arith.constant 1 : index
      %c0_33 = arith.constant 0 : index
      %c0_34 = arith.constant 0 : index
      %49 = vector.load %arg8[%c1_32, %c0_33, %c0_34] : memref<4x8x16xf32, #tpu.memory_space<vmem>>, vector<1x8x16xf32>
      %50 = vector.shape_cast %49 : vector<1x8x16xf32> to vector<8x16xf32>
      %51 = vector.shape_cast %48 : vector<8x16xf32> to vector<1x8x16xf32>
      tpu.vector_store %arg8[%c1_32, %c0_33, %c0_34], %51 {strides = array<i32>} : memref<4x8x16xf32, #tpu.memory_space<vmem>>, vector<1x8x16xf32>,
      %c0_35 = arith.constant 0 : index
      %c2_36 = arith.constant 2 : index
      %c0_37 = arith.constant 0 : index
      %c0_38 = arith.constant 0 : index
      %52 = vector.load %arg3[%c0_35, %c2_36, %c0_37, %c0_38] : memref<1x4x8x16xf32, #tpu.memory_space<vmem>>, vector<1x1x8x16xf32>
      %53 = vector.shape_cast %52 : vector<1x1x8x16xf32> to vector<8x16xf32>
      %cst_39 = arith.constant dense<0.000000e+00> : vector<8x16xf32>
      %54 = tpu.matmul %53, %39, %cst_39 {dimension_numbers = #tpu.dot_dimension_numbers<[1], [0], [0], [1], [0, 0, 1, 1], [], []>} : vector<8x16xf32>, vector<16x16xf32>, vector<8x16xf32> -> vector<8x16xf32>
      %c2_40 = arith.constant 2 : index
      %c0_41 = arith.constant 0 : index
      %c0_42 = arith.constant 0 : index
      %55 = vector.load %arg8[%c2_40, %c0_41, %c0_42] : memref<4x8x16xf32, #tpu.memory_space<vmem>>, vector<1x8x16xf32>
      %56 = vector.shape_cast %55 : vector<1x8x16xf32> to vector<8x16xf32>
      %57 = vector.shape_cast %54 : vector<8x16xf32> to vector<1x8x16xf32>
      tpu.vector_store %arg8[%c2_40, %c0_41, %c0_42], %57 {strides = array<i32>} : memref<4x8x16xf32, #tpu.memory_space<vmem>>, vector<1x8x16xf32>,
      %c0_43 = arith.constant 0 : index
      %c3_44 = arith.constant 3 : index
      %c0_45 = arith.constant 0 : index
      %c0_46 = arith.constant 0 : index
      %58 = vector.load %arg3[%c0_43, %c3_44, %c0_45, %c0_46] : memref<1x4x8x16xf32, #tpu.memory_space<vmem>>, vector<1x1x8x16xf32>
      %59 = vector.shape_cast %58 : vector<1x1x8x16xf32> to vector<8x16xf32>
      %cst_47 = arith.constant dense<0.000000e+00> : vector<8x16xf32>
      %60 = tpu.matmul %59, %39, %cst_47 {dimension_numbers = #tpu.dot_dimension_numbers<[1], [0], [0], [1], [0, 0, 1, 1], [], []>} : vector<8x16xf32>, vector<16x16xf32>, vector<8x16xf32> -> vector<8x16xf32>
      %c3_48 = arith.constant 3 : index
      %c0_49 = arith.constant 0 : index
      %c0_50 = arith.constant 0 : index
      %61 = vector.load %arg8[%c3_48, %c0_49, %c0_50] : memref<4x8x16xf32, #tpu.memory_space<vmem>>, vector<1x8x16xf32>
      %62 = vector.shape_cast %61 : vector<1x8x16xf32> to vector<8x16xf32>
      %63 = vector.shape_cast %60 : vector<8x16xf32> to vector<1x8x16xf32>
      tpu.vector_store %arg8[%c3_48, %c0_49, %c0_50], %63 {strides = array<i32>} : memref<4x8x16xf32, #tpu.memory_space<vmem>>, vector<1x8x16xf32>,
    } else {
    }
    %cst = arith.constant 0.000000e+00 : f32
    %3 = vector.broadcast %cst : f32 to vector<8x16xf32>
    %4 = arith.index_cast %arg2 : i32 to index
    %c0 = arith.constant 0 : index
    %5 = memref.load %arg5[%4, %c0] : memref<8x4xf32, #tpu.memory_space<smem>>
    %c0_1 = arith.constant 0 : index
    %c0_2 = arith.constant 0 : index
    %c0_3 = arith.constant 0 : index
    %6 = vector.load %arg8[%c0_1, %c0_2, %c0_3] : memref<4x8x16xf32, #tpu.memory_space<vmem>>, vector<1x8x16xf32>
    %7 = vector.shape_cast %6 : vector<1x8x16xf32> to vector<8x16xf32>
    %8 = vector.broadcast %5 : f32 to vector<8x16xf32>
    %9 = arith.mulf %8, %7 : vector<8x16xf32>
    %10 = arith.addf %3, %9 : vector<8x16xf32>
    %11 = arith.index_cast %arg2 : i32 to index
    %c1 = arith.constant 1 : index
    %12 = memref.load %arg5[%11, %c1] : memref<8x4xf32, #tpu.memory_space<smem>>
    %c1_4 = arith.constant 1 : index
    %c0_5 = arith.constant 0 : index
    %c0_6 = arith.constant 0 : index
    %13 = vector.load %arg8[%c1_4, %c0_5, %c0_6] : memref<4x8x16xf32, #tpu.memory_space<vmem>>, vector<1x8x16xf32>
    %14 = vector.shape_cast %13 : vector<1x8x16xf32> to vector<8x16xf32>
    %15 = vector.broadcast %12 : f32 to vector<8x16xf32>
    %16 = arith.mulf %15, %14 : vector<8x16xf32>
    %17 = arith.addf %10, %16 : vector<8x16xf32>
    %18 = arith.index_cast %arg2 : i32 to index
    %c2 = arith.constant 2 : index
    %19 = memref.load %arg5[%18, %c2] : memref<8x4xf32, #tpu.memory_space<smem>>
    %c2_7 = arith.constant 2 : index
    %c0_8 = arith.constant 0 : index
    %c0_9 = arith.constant 0 : index
    %20 = vector.load %arg8[%c2_7, %c0_8, %c0_9] : memref<4x8x16xf32, #tpu.memory_space<vmem>>, vector<1x8x16xf32>
    %21 = vector.shape_cast %20 : vector<1x8x16xf32> to vector<8x16xf32>
    %22 = vector.broadcast %19 : f32 to vector<8x16xf32>
    %23 = arith.mulf %22, %21 : vector<8x16xf32>
    %24 = arith.addf %17, %23 : vector<8x16xf32>
    %25 = arith.index_cast %arg2 : i32 to index
    %c3 = arith.constant 3 : index
    %26 = memref.load %arg5[%25, %c3] : memref<8x4xf32, #tpu.memory_space<smem>>
    %c3_10 = arith.constant 3 : index
    %c0_11 = arith.constant 0 : index
    %c0_12 = arith.constant 0 : index
    %27 = vector.load %arg8[%c3_10, %c0_11, %c0_12] : memref<4x8x16xf32, #tpu.memory_space<vmem>>, vector<1x8x16xf32>
    %28 = vector.shape_cast %27 : vector<1x8x16xf32> to vector<8x16xf32>
    %29 = vector.broadcast %26 : f32 to vector<8x16xf32>
    %30 = arith.mulf %29, %28 : vector<8x16xf32>
    %31 = arith.addf %24, %30 : vector<8x16xf32>
    %32 = arith.index_cast %arg2 : i32 to index
    %33 = memref.load %arg6[%32] : memref<8xf32, #tpu.memory_space<smem>>
    %34 = vector.broadcast %33 : f32 to vector<8x16xf32>
    %35 = arith.addf %31, %34 : vector<8x16xf32>
    %c0_13 = arith.constant 0 : index
    %c0_14 = arith.constant 0 : index
    %c0_15 = arith.constant 0 : index
    %c0_16 = arith.constant 0 : index
    %36 = vector.load %arg7[%c0_13, %c0_14, %c0_15, %c0_16] : memref<1x1x8x16xf32, #tpu.memory_space<vmem>>, vector<1x1x8x16xf32>
    %37 = vector.shape_cast %36 : vector<1x1x8x16xf32> to vector<8x16xf32>
    %38 = vector.shape_cast %35 : vector<8x16xf32> to vector<1x1x8x16xf32>
    tpu.vector_store %arg7[%c0_13, %c0_14, %c0_15, %c0_16], %38 {strides = array<i32>} : memref<1x1x8x16xf32, #tpu.memory_space<vmem>>, vector<1x1x8x16xf32>,
    return
  }
  func.func @transform_0(%arg0: i32, %arg1: i32, %arg2: i32) -> (i32, i32, i32, i32) {
    %c0_i32 = arith.constant 0 : i32
    %c0_i32_0 = arith.constant 0 : i32
    %c0_i32_1 = arith.constant 0 : i32
    return %arg0, %c0_i32, %arg1, %c0_i32_0 : i32, i32, i32, i32
  }
  func.func @transform_1(%arg0: i32, %arg1: i32, %arg2: i32) -> (i32, i32) {
    %c0_i32 = arith.constant 0 : i32
    %c0_i32_0 = arith.constant 0 : i32
    %c0_i32_1 = arith.constant 0 : i32
    return %c0_i32, %c0_i32_0 : i32, i32
  }
  func.func @transform_2(%arg0: i32, %arg1: i32, %arg2: i32) -> (i32, i32) {
    %c0_i32 = arith.constant 0 : i32
    %c0_i32_0 = arith.constant 0 : i32
    %c0_i32_1 = arith.constant 0 : i32
    return %c0_i32, %c0_i32_0 : i32, i32
  }
  func.func @transform_3(%arg0: i32, %arg1: i32, %arg2: i32) -> i32 {
    %c0_i32 = arith.constant 0 : i32
    %c0_i32_0 = arith.constant 0 : i32
    return %c0_i32 : i32
  }
  func.func @transform_4(%arg0: i32, %arg1: i32, %arg2: i32) -> (i32, i32, i32, i32) {
    %c0_i32 = arith.constant 0 : i32
    %c0_i32_0 = arith.constant 0 : i32
    return %arg0, %arg2, %arg1, %c0_i32 : i32, i32, i32, i32
  }
}

</mosaic_0001>

<llo_original>
// kernel: tpu_custom_call.1
$region0: #{tpu_custom_call.1}
  #allocation0 [shape = 'u32[]', space=smem, size = 0x4, offset = 0x4, fixed_abs, tag = 'smem constant byte address 0x4 - core index']
  #allocation1 [shape = 'u32[144,128]{1,0:T(1,128)}', space=vmem, size = 0x12000, scoped, tag = 'internal scratch']
  #allocation2 [shape = 'f32[4,8,16]{2,1,0:T(8,128)}', space=vmem, size = 0x4000, scoped, tag = 'scratch operand']
  %s0 = inlined_call_operand.hbm [shape: f32[2,4,8,16], index: 0, kind: input, shape index: {}]
  %s1 = inlined_call_operand.hbm [shape: f32[16,16], index: 1, kind: input, shape index: {}]
  %s2 = inlined_call_operand.vmem [shape: f32[8,4], index: 2, kind: input, shape index: {}]
  %s3 = inlined_call_operand.vmem [shape: f32[8], index: 3, kind: input, shape index: {}]
  %s4 = inlined_call_operand.hbm [shape: f32[2,8,8,16], index: 4, kind: output, shape index: {}]
  %s5 = sld [smem:[#allocation0]]
  $region69: #{tpu_custom_call.1} parent=0
    _
  %s7 = ssub.s32 1, %s5
  %s8 = scalar_select 0, %s7, %s5
  $region1: #{tpu_custom_call.1} parent=0
    #allocation3 [shape = 'u8[32768]{0}', space=vmem, size = 0x8000, scoped, tag = 'input window, operand 0']
    #allocation4 [shape = 's32[2]{0}', space=sflag, size = 0x8, scoped, tag = 'scoped memory for tpu_custom_call.1']
    #allocation5 [shape = 's32[2]{0}', space=sflag, size = 0x8, scoped, tag = 'scoped memory for tpu_custom_call.1']
    #allocation6 [shape = 's32[2]{0}', space=sflag, size = 0x8, scoped, tag = 'scoped memory for tpu_custom_call.1']
    #allocation7 [shape = 'u8[8192]{0}', space=vmem, size = 0x2000, scoped, tag = 'input window, operand 1, single buffered']
    #allocation8 [shape = 's32[1]{0}', space=sflag, size = 0x4, scoped, tag = 'scoped memory for tpu_custom_call.1']
    #allocation9 [shape = 'u8[4096]{0}', space=smem, size = 0x1000, scoped, tag = 'input window, operand 2, single buffered']
    #allocation10 [shape = 'u8[512]{0}', space=smem, size = 0x200, scoped, tag = 'input window, operand 3, single buffered']
    #allocation11 [shape = 's32[1]{0}', space=sflag, size = 0x4, scoped, tag = 'scoped memory for tpu_custom_call.1']
    #allocation12 [shape = 'u8[8192]{0}', space=vmem, size = 0x2000, scoped, tag = 'output window, operand 0']
    %9 = vsyncpa [#allocation4], 0
    %s10 = scalar_lea.sflag [#allocation4], 1
    %11 = vsyncpa %s10, 0
    %12 = vsyncpa [#allocation8], 0
    %13 = vsyncpa [#allocation6], 0
    %14 = vsyncpa [#allocation11], 0
    %15 = vsyncpa [#allocation5], 0
    %s16 = scalar_lea.sflag [#allocation5], 1
    %17 = vsyncpa %s16, 0
    loop: start=0, step=1, limit=18
    $region2: #{tpu_custom_call.1} parent=1 // loop_pre_header
      _
    $region3: #{tpu_custom_call.1} parent=1 // loop_header
      %s19 = sphi 0, %s23
      %p20 = scmp.ge.s32.totalorder %s19, 18
      %s26 = sphi 0, %s45
      %s27 = sphi 0, %s41
      %s28 = sphi 0, %s37
      %s29 = sphi 0, %s26
      %s30 = sphi 0, %s27
      %s31 = sphi 0, %s28
      %s32 = sphi 0, %s29
      %s33 = sphi 0, %s30
      %s34 = sphi 0, %s31
      %s50 = sphi 0, %s52
      %s53 = sphi 0, %s50
      %s54 = sphi 0, %s53
      %s70 = sphi 0, %s54
      %s74 = sphi 0, %s74
      %s76 = sphi 0, %s74
      %s77 = sphi 0, %s76
      %s91 = sphi 0, %s77
      %s95 = sphi 0, %s95
      %s97 = sphi 0, %s95
      %s98 = sphi 0, %s97
      %s112 = sphi 0, %s98
      %s116 = sphi 0, %s116
      %s118 = sphi 0, %s116
      %s119 = sphi 0, %s118
      %s133 = sphi 0, %s119
      %s143 = sphi 0, %s145
      %s146 = sphi 0, %s143
      %s147 = sphi 0, %s146
      %s163 = sphi 0, %s147
    $region4: #{tpu_custom_call.1} parent=1 // loop_header_branch
      %22 = sbr.rel (%p20) target = $region8
    $region5: #{tpu_custom_call.1} parent=1 // loop_body
      %s24 = ssub.s32 %s19, 1
      %s25 = ssub.s32 %s19, 2
      %s35 = sadd.s32 1, %s28
      %p36 = scmp.ge.s32.totalorder %s35, 8
      %s37 = scalar_select %p36, 0, %s35
      %s38 = sadd.s32 1, %s27
      %s39 = scalar_select %p36, %s38, %s27
      %p40 = scmp.ge.s32.totalorder %s39, 1
      %s41 = scalar_select %p40, 0, %s39
      %s42 = sadd.s32 1, %s26
      %s43 = scalar_select %p40, %s42, %s26
      %p44 = scmp.ge.s32.totalorder %s43, 2
      %s45 = scalar_select %p44, 0, %s43
      %s46 = ssub.s32 %s26, %s45
      %s47 = ssub.s32 %s27, %s41
      %s48 = sor.u32 %s46, %s47
      %p49 = scmp.eq.s32.totalorder %s48, 0
      %s51 = sadd.s32 %s50, 1
      %s52 = scalar_select %p49, %s50, %s51
      %p55 = pneg %p49
      %p56 = scmp.eq.s32.totalorder %s19, 15
      %p57 = por %p55, %p56
      %p58 = scmp.ne.s32.totalorder %s50, %s53
      %p59 = scmp.eq.s32.totalorder %s19, 0
      %p60 = por %p58, %p59
      %p61 = scmp.ne.s32.totalorder %s50, %s53
      %p62 = scmp.eq.s32.totalorder %s24, 15
      %p63 = por %p61, %p62
      %p64 = scmp.ne.s32.totalorder %s53, %s54
      %p65 = scmp.eq.s32.totalorder %s24, 0
      %p66 = por %p64, %p65
      %p67 = scmp.ne.s32.totalorder %s53, %s54
      %p68 = scmp.eq.s32.totalorder %s25, 15
      %p69 = por %p67, %p68
      %p71 = scmp.ne.s32.totalorder %s54, %s70
      %p72 = scmp.eq.s32.totalorder %s25, 0
      %p73 = por %p71, %p72
      %s75 = sadd.s32 %s74, 1
      %p78 = scmp.eq.s32.totalorder %s19, 15
      %p79 = scmp.ne.s32.totalorder %s74, %s76
      %p80 = scmp.eq.s32.totalorder %s19, 0
      %p81 = por %p79, %p80
      %p82 = scmp.ne.s32.totalorder %s74, %s76
      %p83 = scmp.eq.s32.totalorder %s24, 15
      %p84 = por %p82, %p83
      %p85 = scmp.ne.s32.totalorder %s76, %s77
      %p86 = scmp.eq.s32.totalorder %s24, 0
      %p87 = por %p85, %p86
      %p88 = scmp.ne.s32.totalorder %s76, %s77
      %p89 = scmp.eq.s32.totalorder %s25, 15
      %p90 = por %p88, %p89
      %p92 = scmp.ne.s32.totalorder %s77, %s91
      %p93 = scmp.eq.s32.totalorder %s25, 0
      %p94 = por %p92, %p93
      %s96 = sadd.s32 %s95, 1
      %p99 = scmp.eq.s32.totalorder %s19, 15
      %p100 = scmp.ne.s32.totalorder %s95, %s97
      %p101 = scmp.eq.s32.totalorder %s19, 0
      %p102 = por %p100, %p101
      %p103 = scmp.ne.s32.totalorder %s95, %s97
      %p104 = scmp.eq.s32.totalorder %s24, 15
      %p105 = por %p103, %p104
      %p106 = scmp.ne.s32.totalorder %s97, %s98
      %p107 = scmp.eq.s32.totalorder %s24, 0
      %p108 = por %p106, %p107
      %p109 = scmp.ne.s32.totalorder %s97, %s98
      %p110 = scmp.eq.s32.totalorder %s25, 15
      %p111 = por %p109, %p110
      %p113 = scmp.ne.s32.totalorder %s98, %s112
      %p114 = scmp.eq.s32.totalorder %s25, 0
      %p115 = por %p113, %p114
      %s117 = sadd.s32 %s116, 1
      %p120 = scmp.eq.s32.totalorder %s19, 15
      %p121 = scmp.ne.s32.totalorder %s116, %s118
      %p122 = scmp.eq.s32.totalorder %s19, 0
      %p123 = por %p121, %p122
      %p124 = scmp.ne.s32.totalorder %s116, %s118
      %p125 = scmp.eq.s32.totalorder %s24, 15
      %p126 = por %p124, %p125
      %p127 = scmp.ne.s32.totalorder %s118, %s119
      %p128 = scmp.eq.s32.totalorder %s24, 0
      %p129 = por %p127, %p128
      %p130 = scmp.ne.s32.totalorder %s118, %s119
      %p131 = scmp.eq.s32.totalorder %s25, 15
      %p132 = por %p130, %p131
      %p134 = scmp.ne.s32.totalorder %s119, %s133
      %p135 = scmp.eq.s32.totalorder %s25, 0
      %p136 = por %p134, %p135
      %s137 = ssub.s32 %s26, %s45
      %s138 = ssub.s32 %s28, %s37
      %s139 = sor.u32 %s137, %s138
      %s140 = ssub.s32 %s27, %s41
      %s141 = sor.u32 %s139, %s140
      %p142 = scmp.eq.s32.totalorder %s141, 0
      %s144 = sadd.s32 %s143, 1
      %s145 = scalar_select %p142, %s143, %s144
      %p148 = pneg %p142
      %p149 = scmp.eq.s32.totalorder %s19, 15
      %p150 = por %p148, %p149
      %p151 = scmp.ne.s32.totalorder %s143, %s146
      %p152 = scmp.eq.s32.totalorder %s19, 0
      %p153 = por %p151, %p152
      %p154 = scmp.ne.s32.totalorder %s143, %s146
      %p155 = scmp.eq.s32.totalorder %s24, 15
      %p156 = por %p154, %p155
      %p157 = scmp.ne.s32.totalorder %s146, %s147
      %p158 = scmp.eq.s32.totalorder %s24, 0
      %p159 = por %p157, %p158
      %p160 = scmp.ne.s32.totalorder %s146, %s147
      %p161 = scmp.eq.s32.totalorder %s25, 15
      %p162 = por %p160, %p161
      %p164 = scmp.ne.s32.totalorder %s147, %s163
      %p165 = scmp.eq.s32.totalorder %s25, 0
      %p166 = por %p164, %p165
      %p167 = scmp.le.s32.totalorder 1, %s19
      %p168 = scmp.lt.s32.totalorder %s19, 17
      %p169 = pnand %p167, %p168
      %p170 = pneg %p169
      // Predicated region
      $region9: #{tpu_custom_call.1} parent=5 // pred_check
        _
      $region10: #{tpu_custom_call.1} parent=5 // pred_check_branch
        %172 = sbr.rel (%p169) target = $region12
      $region11: #{tpu_custom_call.1} parent=5 // pred_region
        %s173 = ssub.s32 %s19, 1
        // Predicated region
        $region13: #{tpu_custom_call.1} parent=11 // pred_check
          %p174 = pneg %p87
        $region14: #{tpu_custom_call.1} parent=11 // pred_check_branch
          %176 = sbr.rel (%p174) target = $region16
        $region15: #{tpu_custom_call.1} parent=11 // pred_region
          %s178 = ssub.s32 256, 256
          %179 = vsyncadd [#allocation8], %s178
          %s180 = sshll.u32 [#allocation7], 4
          %s181 = int_to_ptr.vmem [resolvable:$true] %s180
          %186 = dma.hbm_to_vmem [thread:$0]  %s1, 256, %s181, [#allocation8], 128, 128, 8
        $region16: #{tpu_custom_call.1} parent=11 // pred_fallthru
          _
        // Predicated region
        $region17: #{tpu_custom_call.1} parent=11 // pred_check
          %p187 = pneg %p108
        $region18: #{tpu_custom_call.1} parent=11 // pred_check_branch
          %189 = sbr.rel (%p187) target = $region20
        $region19: #{tpu_custom_call.1} parent=11 // pred_region
          %s191 = ssub.s32 128, 128
          %192 = vsyncadd [#allocation6], %s191
          %s194 = sshll.u32 %s2, 4
          %s195 = int_to_ptr.vmem [resolvable:$true] %s194
          %197 = dma.vmem_to_smem %s195, 128, [#allocation9], [#allocation6]
        $region20: #{tpu_custom_call.1} parent=11 // pred_fallthru
          _
        // Predicated region
        $region21: #{tpu_custom_call.1} parent=11 // pred_check
          %p198 = pneg %p129
        $region22: #{tpu_custom_call.1} parent=11 // pred_check_branch
          %200 = sbr.rel (%p198) target = $region24
        $region23: #{tpu_custom_call.1} parent=11 // pred_region
          %s202 = ssub.s32 16, 16
          %203 = vsyncadd [#allocation11], %s202
          %s205 = sshll.u32 %s3, 4
          %s206 = int_to_ptr.vmem [resolvable:$true] %s205
          %208 = dma.vmem_to_smem %s206, 16, [#allocation10], [#allocation11]
        $region24: #{tpu_custom_call.1} parent=11 // pred_fallthru
          _
      $region12: #{tpu_custom_call.1} parent=5 // pred_fallthru
        _
      %p209 = scmp.lt.s32.totalorder %s19, 16
      // Predicated region
      $region25: #{tpu_custom_call.1} parent=5 // pred_check
        %p210 = pneg %p209
      $region26: #{tpu_custom_call.1} parent=5 // pred_check_branch
        %212 = sbr.rel (%p210) target = $region28
      $region27: #{tpu_custom_call.1} parent=5 // pred_region
        // Predicated region
        $region29: #{tpu_custom_call.1} parent=27 // pred_check
          %p213 = pneg %p60
        $region30: #{tpu_custom_call.1} parent=27 // pred_check_branch
          %215 = sbr.rel (%p213) target = $region32
        $region31: #{tpu_custom_call.1} parent=27 // pred_region
          %s216 = sand.u32 %s50, 1
          %s217 = scalar_lea.sflag [#allocation4], %s216
          %s218 = sand.u32 %s50, 1
          %s219 = smul.addr %s218, 32
          %s220 = scalar_lea.vmem [#allocation3], %s219
          %s222 = ssub.s32 512, 512
          %223 = vsyncadd %s217, %s222
          %s224 = smul.addr %s26, 4
          %s225 = sadd.s32 %s27, %s224
          %s226 = smul.addr %s225, 128
          %s227 = scalar_lea.hbm %s0, %s226
          %s228 = sshll.u32 %s220, 4
          %s229 = int_to_ptr.vmem [resolvable:$true] %s228
          %234 = dma.hbm_to_vmem [thread:$0]  %s227, 512, %s229, %s217, 128, 128, 8
        $region32: #{tpu_custom_call.1} parent=27 // pred_fallthru
          _
      $region28: #{tpu_custom_call.1} parent=5 // pred_fallthru
        _
      %p235 = scmp.le.s32.totalorder 1, %s19
      %p236 = scmp.lt.s32.totalorder %s19, 17
      %p237 = pnand %p235, %p236
      %p238 = pneg %p237
      // Predicated region
      $region33: #{tpu_custom_call.1} parent=5 // pred_check
        _
      $region34: #{tpu_custom_call.1} parent=5 // pred_check_branch
        %240 = sbr.rel (%p237) target = $region36
      $region35: #{tpu_custom_call.1} parent=5 // pred_region
        %s241 = ssub.s32 %s19, 1
        %s242 = sand.u32 %s53, 1
        %s243 = scalar_lea.sflag [#allocation4], %s242
        %s244 = sand.u32 %s53, 1
        %s245 = smul.addr %s244, 32
        %s246 = scalar_lea.vmem [#allocation3], %s245
        // Predicated region
        $region37: #{tpu_custom_call.1} parent=35 // pred_check
          %p247 = pneg %p66
        $region38: #{tpu_custom_call.1} parent=35 // pred_check_branch
          %249 = sbr.rel (%p247) target = $region40
        $region39: #{tpu_custom_call.1} parent=35 // pred_region
          %250 = dma.done %s243, 512
        $region40: #{tpu_custom_call.1} parent=35 // pred_fallthru
          _
        // Predicated region
        $region41: #{tpu_custom_call.1} parent=35 // pred_check
          %p251 = pneg %p87
        $region42: #{tpu_custom_call.1} parent=35 // pred_check_branch
          %253 = sbr.rel (%p251) target = $region44
        $region43: #{tpu_custom_call.1} parent=35 // pred_region
          %254 = dma.done [#allocation8], 256
        $region44: #{tpu_custom_call.1} parent=35 // pred_fallthru
          _
        // Predicated region
        $region45: #{tpu_custom_call.1} parent=35 // pred_check
          %p255 = pneg %p108
        $region46: #{tpu_custom_call.1} parent=35 // pred_check_branch
          %257 = sbr.rel (%p255) target = $region48
        $region47: #{tpu_custom_call.1} parent=35 // pred_region
          %258 = dma.done [#allocation6], 128
        $region48: #{tpu_custom_call.1} parent=35 // pred_fallthru
          _
        // Predicated region
        $region49: #{tpu_custom_call.1} parent=35 // pred_check
          %p259 = pneg %p129
        $region50: #{tpu_custom_call.1} parent=35 // pred_check_branch
          %261 = sbr.rel (%p259) target = $region52
        $region51: #{tpu_custom_call.1} parent=35 // pred_region
          %262 = dma.done [#allocation11], 16
        $region52: #{tpu_custom_call.1} parent=35 // pred_fallthru
          _
        %263 = sfence
        %s264 = sand.u32 %s53, 1
        %s265 = scalar_lea.sflag [#allocation4], %s264
        %s266 = sand.u32 %s53, 1
        %s267 = smul.addr %s266, 32
        %s268 = scalar_lea.vmem [#allocation3], %s267
        %p269 = pneg %p66
        %p270 = pneg %p63
        %p271 = pneg %p87
        %p272 = pneg %p84
        %p273 = pneg %p108
        %p274 = pneg %p105
        %p275 = pneg %p129
        %p276 = pneg %p126
        %p277 = pneg %p159
        %p278 = pneg %p156
        %s279 = sand.u32 %s146, 1
        %s280 = scalar_lea.sflag [#allocation5], %s279
        %s281 = sand.u32 %s146, 1
        %s282 = smul.addr %s281, 8
        %s283 = scalar_lea.vmem [#allocation12], %s282
        %p284 = scmp.eq.s32.totalorder %s31, 0
        // Predicated region
        $region53: #{tpu_custom_call.1} parent=35 // pred_check
          %p285 = pneg %p284
        $region54: #{tpu_custom_call.1} parent=35 // pred_check_branch
          %287 = sbr.rel (%p285) target = $region56
        $region55: #{tpu_custom_call.1} parent=35 // pred_region
          %v288 = vld [vmem:[#allocation7] sm:$0xff]
          %v289 = vld [vmem:[#allocation7 + $0x8] sm:$0xff]
          %v290 = vld [vmem:[%s246] sm:$0xff]
          %vm291 = vcmask 130048
          %v293 = vsel %vm291, %v290, 0
          %295 = vmatprep.subr.mxu0 0.0
          %296 = vmatpush1.msra.mxu0 %v288
          %297 = vmatprep.subr.mxu0 0.0
          %298 = vmatpush1.msra.mxu0 %v289
          %299 = vmatprep.subr.mxu0 0.0
          %300 = vmatpush1.msra.mxu0 0.0
          %301 = vmatprep.subr.mxu0 0.0
          %302 = vmatpush1.msra.mxu0 0.0
          %303 = vmatprep.subr.mxu0 0.0
          %304 = vmatpush1.msra.mxu0 0.0
          %305 = vmatprep.subr.mxu0 0.0
          %306 = vmatpush1.msra.mxu0 0.0
          %307 = vmatprep.subr.mxu0 0.0
          %308 = vmatpush1.msra.mxu0 0.0
          %309 = vmatprep.subr.mxu0 0.0
          %310 = vmatpush1.msra.mxu0 0.0
          %311 = vmatprep.subr.mxu0 0.0
          %312 = vmatpush1.msra.mxu0 0.0
          %313 = vmatprep.subr.mxu0 0.0
          %314 = vmatpush1.msra.mxu0 0.0
          %315 = vmatprep.subr.mxu0 0.0
          %316 = vmatpush1.msra.mxu0 0.0
          %317 = vmatprep.subr.mxu0 0.0
          %318 = vmatpush1.msra.mxu0 0.0
          %319 = vmatprep.subr.mxu0 0.0
          %320 = vmatpush1.msra.mxu0 0.0
          %321 = vmatprep.subr.mxu0 0.0
          %322 = vmatpush1.msra.mxu0 0.0
          %323 = vmatprep.subr.mxu0 0.0
          %324 = vmatpush1.msra.mxu0 0.0
          %325 = vmatprep.subr.mxu0 0.0
          %326 = vmatpush1.msra.mxu0 0.0
          %327 = vmatprep.subr.mxu0 0.0
          %328 = vmatpush1.msra.mxu0 0.0
          %329 = vmatprep.subr.mxu0 0.0
          %330 = vmatpush1.msra.mxu0 0.0
          %331 = vmatprep.subr.mxu0 0.0
          %332 = vmatpush1.msra.mxu0 0.0
          %333 = vmatprep.subr.mxu0 0.0
          %334 = vmatpush1.msra.mxu0 0.0
          %335 = vmatprep.subr.mxu0 0.0
          %336 = vmatpush1.msra.mxu0 0.0
          %337 = vmatprep.subr.mxu0 0.0
          %338 = vmatpush1.msra.mxu0 0.0
          %339 = vmatprep.subr.mxu0 0.0
          %340 = vmatpush1.msra.mxu0 0.0
          %341 = vmatprep.subr.mxu0 0.0
          %342 = vmatpush1.msra.mxu0 0.0
          %343 = vmatprep.subr.mxu0 0.0
          %344 = vmatpush1.msra.mxu0 0.0
          %345 = vmatprep.subr.mxu0 0.0
          %346 = vmatpush1.msra.mxu0 0.0
          %347 = vmatprep.subr.mxu0 0.0
          %348 = vmatpush1.msra.mxu0 0.0
          %349 = vmatprep.subr.mxu0 0.0
          %350 = vmatpush1.msra.mxu0 0.0
          %351 = vmatprep.subr.mxu0 0.0
          %352 = vmatpush1.msra.mxu0 0.0
          %353 = vmatprep.subr.mxu0 0.0
          %354 = vmatpush1.msra.mxu0 0.0
          %355 = vmatprep.subr.mxu0 0.0
          %356 = vmatpush1.msra.mxu0 0.0
          %357 = vmatprep.subr.mxu0 0.0
          %358 = vmatpush1.msra.mxu0 0.0
          %359 = vmatprep.mubr.f32.mxu0 0.0
          %360 = vmatmul.mubr.f32.gmra.mrb[0].mxu0 %v293
          %v361 = vpop.f32.mrb[0].mxu0
          %v362 = vadd.f32 0.0, %v361
          %v363 = vpop.f32.mrb[0].mxu0
          %364 = vdwg.mxu0
          %365 = vst.msk [vmem:[#allocation2] sm:$0xff] %vm291, %v362
          %s366 = scalar_lea.vmem %s246, 8 [#allocation3]
          %v367 = vld [vmem:[%s366] sm:$0xff]
          %v369 = vsel %vm291, %v367, 0
          %371 = vmatprep.subr.mxu0 0.0
          %372 = vmatpush1.msra.mxu0 %v288
          %373 = vmatprep.subr.mxu0 0.0
          %374 = vmatpush1.msra.mxu0 %v289
          %375 = vmatprep.subr.mxu0 0.0
          %376 = vmatpush1.msra.mxu0 0.0
          %377 = vmatprep.subr.mxu0 0.0
          %378 = vmatpush1.msra.mxu0 0.0
          %379 = vmatprep.subr.mxu0 0.0
          %380 = vmatpush1.msra.mxu0 0.0
          %381 = vmatprep.subr.mxu0 0.0
          %382 = vmatpush1.msra.mxu0 0.0
          %383 = vmatprep.subr.mxu0 0.0
          %384 = vmatpush1.msra.mxu0 0.0
          %385 = vmatprep.subr.mxu0 0.0
          %386 = vmatpush1.msra.mxu0 0.0
          %387 = vmatprep.subr.mxu0 0.0
          %388 = vmatpush1.msra.mxu0 0.0
          %389 = vmatprep.subr.mxu0 0.0
          %390 = vmatpush1.msra.mxu0 0.0
          %391 = vmatprep.subr.mxu0 0.0
          %392 = vmatpush1.msra.mxu0 0.0
          %393 = vmatprep.subr.mxu0 0.0
          %394 = vmatpush1.msra.mxu0 0.0
          %395 = vmatprep.subr.mxu0 0.0
          %396 = vmatpush1.msra.mxu0 0.0
          %397 = vmatprep.subr.mxu0 0.0
          %398 = vmatpush1.msra.mxu0 0.0
          %399 = vmatprep.subr.mxu0 0.0
          %400 = vmatpush1.msra.mxu0 0.0
          %401 = vmatprep.subr.mxu0 0.0
          %402 = vmatpush1.msra.mxu0 0.0
          %403 = vmatprep.subr.mxu0 0.0
          %404 = vmatpush1.msra.mxu0 0.0
          %405 = vmatprep.subr.mxu0 0.0
          %406 = vmatpush1.msra.mxu0 0.0
          %407 = vmatprep.subr.mxu0 0.0
          %408 = vmatpush1.msra.mxu0 0.0
          %409 = vmatprep.subr.mxu0 0.0
          %410 = vmatpush1.msra.mxu0 0.0
          %411 = vmatprep.subr.mxu0 0.0
          %412 = vmatpush1.msra.mxu0 0.0
          %413 = vmatprep.subr.mxu0 0.0
          %414 = vmatpush1.msra.mxu0 0.0
          %415 = vmatprep.subr.mxu0 0.0
          %416 = vmatpush1.msra.mxu0 0.0
          %417 = vmatprep.subr.mxu0 0.0
          %418 = vmatpush1.msra.mxu0 0.0
          %419 = vmatprep.subr.mxu0 0.0
          %420 = vmatpush1.msra.mxu0 0.0
          %421 = vmatprep.subr.mxu0 0.0
          %422 = vmatpush1.msra.mxu0 0.0
          %423 = vmatprep.subr.mxu0 0.0
          %424 = vmatpush1.msra.mxu0 0.0
          %425 = vmatprep.subr.mxu0 0.0
          %426 = vmatpush1.msra.mxu0 0.0
          %427 = vmatprep.subr.mxu0 0.0
          %428 = vmatpush1.msra.mxu0 0.0
          %429 = vmatprep.subr.mxu0 0.0
          %430 = vmatpush1.msra.mxu0 0.0
          %431 = vmatprep.subr.mxu0 0.0
          %432 = vmatpush1.msra.mxu0 0.0
          %433 = vmatprep.subr.mxu0 0.0
          %434 = vmatpush1.msra.mxu0 0.0
          %435 = vmatprep.mubr.f32.mxu0 0.0
          %436 = vmatmul.mubr.f32.gmra.mrb[0].mxu0 %v369
          %v437 = vpop.f32.mrb[0].mxu0
          %v438 = vadd.f32 0.0, %v437
          %v439 = vpop.f32.mrb[0].mxu0
          %440 = vdwg.mxu0
          %s441 = scalar_lea.vmem [#allocation2], 8
          %442 = vst.msk [vmem:[%s441] sm:$0xff] %vm291, %v438
          %s443 = scalar_lea.vmem %s246, 16 [#allocation3]
          %v444 = vld [vmem:[%s443] sm:$0xff]
          %v446 = vsel %vm291, %v444, 0
          %448 = vmatprep.subr.mxu0 0.0
          %449 = vmatpush1.msra.mxu0 %v288
          %450 = vmatprep.subr.mxu0 0.0
          %451 = vmatpush1.msra.mxu0 %v289
          %452 = vmatprep.subr.mxu0 0.0
          %453 = vmatpush1.msra.mxu0 0.0
          %454 = vmatprep.subr.mxu0 0.0
          %455 = vmatpush1.msra.mxu0 0.0
          %456 = vmatprep.subr.mxu0 0.0
          %457 = vmatpush1.msra.mxu0 0.0
          %458 = vmatprep.subr.mxu0 0.0
          %459 = vmatpush1.msra.mxu0 0.0
          %460 = vmatprep.subr.mxu0 0.0
          %461 = vmatpush1.msra.mxu0 0.0
          %462 = vmatprep.subr.mxu0 0.0
          %463 = vmatpush1.msra.mxu0 0.0
          %464 = vmatprep.subr.mxu0 0.0
          %465 = vmatpush1.msra.mxu0 0.0
          %466 = vmatprep.subr.mxu0 0.0
          %467 = vmatpush1.msra.mxu0 0.0
          %468 = vmatprep.subr.mxu0 0.0
          %469 = vmatpush1.msra.mxu0 0.0
          %470 = vmatprep.subr.mxu0 0.0
          %471 = vmatpush1.msra.mxu0 0.0
          %472 = vmatprep.subr.mxu0 0.0
          %473 = vmatpush1.msra.mxu0 0.0
          %474 = vmatprep.subr.mxu0 0.0
          %475 = vmatpush1.msra.mxu0 0.0
          %476 = vmatprep.subr.mxu0 0.0
          %477 = vmatpush1.msra.mxu0 0.0
          %478 = vmatprep.subr.mxu0 0.0
          %479 = vmatpush1.msra.mxu0 0.0
          %480 = vmatprep.subr.mxu0 0.0
          %481 = vmatpush1.msra.mxu0 0.0
          %482 = vmatprep.subr.mxu0 0.0
          %483 = vmatpush1.msra.mxu0 0.0
          %484 = vmatprep.subr.mxu0 0.0
          %485 = vmatpush1.msra.mxu0 0.0
          %486 = vmatprep.subr.mxu0 0.0
          %487 = vmatpush1.msra.mxu0 0.0
          %488 = vmatprep.subr.mxu0 0.0
          %489 = vmatpush1.msra.mxu0 0.0
          %490 = vmatprep.subr.mxu0 0.0
          %491 = vmatpush1.msra.mxu0 0.0
          %492 = vmatprep.subr.mxu0 0.0
          %493 = vmatpush1.msra.mxu0 0.0
          %494 = vmatprep.subr.mxu0 0.0
          %495 = vmatpush1.msra.mxu0 0.0
          %496 = vmatprep.subr.mxu0 0.0
          %497 = vmatpush1.msra.mxu0 0.0
          %498 = vmatprep.subr.mxu0 0.0
          %499 = vmatpush1.msra.mxu0 0.0
          %500 = vmatprep.subr.mxu0 0.0
          %501 = vmatpush1.msra.mxu0 0.0
          %502 = vmatprep.subr.mxu0 0.0
          %503 = vmatpush1.msra.mxu0 0.0
          %504 = vmatprep.subr.mxu0 0.0
          %505 = vmatpush1.msra.mxu0 0.0
          %506 = vmatprep.subr.mxu0 0.0
          %507 = vmatpush1.msra.mxu0 0.0
          %508 = vmatprep.subr.mxu0 0.0
          %509 = vmatpush1.msra.mxu0 0.0
          %510 = vmatprep.subr.mxu0 0.0
          %511 = vmatpush1.msra.mxu0 0.0
          %512 = vmatprep.mubr.f32.mxu0 0.0
          %513 = vmatmul.mubr.f32.gmra.mrb[0].mxu0 %v446
          %v514 = vpop.f32.mrb[0].mxu0
          %v515 = vadd.f32 0.0, %v514
          %v516 = vpop.f32.mrb[0].mxu0
          %517 = vdwg.mxu0
          %s518 = scalar_lea.vmem [#allocation2], 16
          %519 = vst.msk [vmem:[%s518] sm:$0xff] %vm291, %v515
          %s520 = scalar_lea.vmem %s246, 24 [#allocation3]
          %v521 = vld [vmem:[%s520] sm:$0xff]
          %v523 = vsel %vm291, %v521, 0
          %525 = vmatprep.subr.mxu0 0.0
          %526 = vmatpush1.msra.mxu0 %v288
          %527 = vmatprep.subr.mxu0 0.0
          %528 = vmatpush1.msra.mxu0 %v289
          %529 = vmatprep.subr.mxu0 0.0
          %530 = vmatpush1.msra.mxu0 0.0
          %531 = vmatprep.subr.mxu0 0.0
          %532 = vmatpush1.msra.mxu0 0.0
          %533 = vmatprep.subr.mxu0 0.0
          %534 = vmatpush1.msra.mxu0 0.0
          %535 = vmatprep.subr.mxu0 0.0
          %536 = vmatpush1.msra.mxu0 0.0
          %537 = vmatprep.subr.mxu0 0.0
          %538 = vmatpush1.msra.mxu0 0.0
          %539 = vmatprep.subr.mxu0 0.0
          %540 = vmatpush1.msra.mxu0 0.0
          %541 = vmatprep.subr.mxu0 0.0
          %542 = vmatpush1.msra.mxu0 0.0
          %543 = vmatprep.subr.mxu0 0.0
          %544 = vmatpush1.msra.mxu0 0.0
          %545 = vmatprep.subr.mxu0 0.0
          %546 = vmatpush1.msra.mxu0 0.0
          %547 = vmatprep.subr.mxu0 0.0
          %548 = vmatpush1.msra.mxu0 0.0
          %549 = vmatprep.subr.mxu0 0.0
          %550 = vmatpush1.msra.mxu0 0.0
          %551 = vmatprep.subr.mxu0 0.0
          %552 = vmatpush1.msra.mxu0 0.0
          %553 = vmatprep.subr.mxu0 0.0
          %554 = vmatpush1.msra.mxu0 0.0
          %555 = vmatprep.subr.mxu0 0.0
          %556 = vmatpush1.msra.mxu0 0.0
          %557 = vmatprep.subr.mxu0 0.0
          %558 = vmatpush1.msra.mxu0 0.0
          %559 = vmatprep.subr.mxu0 0.0
          %560 = vmatpush1.msra.mxu0 0.0
          %561 = vmatprep.subr.mxu0 0.0
          %562 = vmatpush1.msra.mxu0 0.0
          %563 = vmatprep.subr.mxu0 0.0
          %564 = vmatpush1.msra.mxu0 0.0
          %565 = vmatprep.subr.mxu0 0.0
          %566 = vmatpush1.msra.mxu0 0.0
          %567 = vmatprep.subr.mxu0 0.0
          %568 = vmatpush1.msra.mxu0 0.0
          %569 = vmatprep.subr.mxu0 0.0
          %570 = vmatpush1.msra.mxu0 0.0
          %571 = vmatprep.subr.mxu0 0.0
          %572 = vmatpush1.msra.mxu0 0.0
          %573 = vmatprep.subr.mxu0 0.0
          %574 = vmatpush1.msra.mxu0 0.0
          %575 = vmatprep.subr.mxu0 0.0
          %576 = vmatpush1.msra.mxu0 0.0
          %577 = vmatprep.subr.mxu0 0.0
          %578 = vmatpush1.msra.mxu0 0.0
          %579 = vmatprep.subr.mxu0 0.0
          %580 = vmatpush1.msra.mxu0 0.0
          %581 = vmatprep.subr.mxu0 0.0
          %582 = vmatpush1.msra.mxu0 0.0
          %583 = vmatprep.subr.mxu0 0.0
          %584 = vmatpush1.msra.mxu0 0.0
          %585 = vmatprep.subr.mxu0 0.0
          %586 = vmatpush1.msra.mxu0 0.0
          %587 = vmatprep.subr.mxu0 0.0
          %588 = vmatpush1.msra.mxu0 0.0
          %589 = vmatprep.mubr.f32.mxu0 0.0
          %590 = vmatmul.mubr.f32.gmra.mrb[0].mxu0 %v523
          %v591 = vpop.f32.mrb[0].mxu0
          %v592 = vadd.f32 0.0, %v591
          %v593 = vpop.f32.mrb[0].mxu0
          %594 = vdwg.mxu0
          %s595 = scalar_lea.vmem [#allocation2], 24
          %596 = vst.msk [vmem:[%s595] sm:$0xff] %vm291, %v592
        $region56: #{tpu_custom_call.1} parent=35 // pred_fallthru
          _
        %s597 = smul.u32 %s31, 128
        %s598 = sld [smem:[#allocation9 + %s597]]
        %v599 = vld [vmem:[#allocation2] sm:$0xff]
        %v600 = vstv %s598
        %v601 = vmul.f32 %v600, %v599
        %v602 = vadd.f32 %v601, 0.0
        %s603 = sadd.s32 %s597, 1
        %s604 = sld [smem:[#allocation9 + %s603]]
        %s605 = scalar_lea.vmem [#allocation2], 8
        %v606 = vld [vmem:[%s605] sm:$0xff]
        %v607 = vstv %s604
        %v608 = vmul.f32 %v607, %v606
        %v609 = vadd.f32 %v602, %v608
        %s610 = sadd.s32 %s597, 2
        %s611 = sld [smem:[#allocation9 + %s610]]
        %s612 = scalar_lea.vmem [#allocation2], 16
        %v613 = vld [vmem:[%s612] sm:$0xff]
        %v614 = vstv %s611
        %v615 = vmul.f32 %v614, %v613
        %v616 = vadd.f32 %v609, %v615
        %s617 = sadd.s32 %s597, 3
        %s618 = sld [smem:[#allocation9 + %s617]]
        %s619 = scalar_lea.vmem [#allocation2], 24
        %v620 = vld [vmem:[%s619] sm:$0xff]
        %v621 = vstv %s618
        %v622 = vmul.f32 %v621, %v620
        %v623 = vadd.f32 %v616, %v622
        %s624 = sld [smem:[#allocation10 + %s31]]
        %v625 = vstv %s624
        %v626 = vadd.f32 %v623, %v625
        %vm627 = vcmask 130048
        %628 = vst.msk [vmem:[%s283] sm:$0xff] %vm627, %v626
        %s629 = sand.u32 %s146, 1
        %s630 = scalar_lea.sflag [#allocation5], %s629
        %s631 = sand.u32 %s146, 1
        %s632 = smul.addr %s631, 8
        %s633 = scalar_lea.vmem [#allocation12], %s632
        // Predicated region
        $region57: #{tpu_custom_call.1} parent=35 // pred_check
          %p634 = pneg %p156
        $region58: #{tpu_custom_call.1} parent=35 // pred_check_branch
          %636 = sbr.rel (%p634) target = $region60
        $region59: #{tpu_custom_call.1} parent=35 // pred_region
          %s638 = ssub.s32 128, 128
          %639 = vsyncadd %s630, %s638
          %s640 = sadd.s32 %s30, %s31
          %s641 = smul.addr %s29, 8
          %s642 = sadd.s32 %s640, %s641
          %s643 = smul.addr %s642, 128
          %s644 = scalar_lea.hbm %s4, %s643
          %s646 = sshll.u32 %s633, 4
          %s647 = int_to_ptr.vmem [resolvable:$true] %s646
          %649 = dma.vmem_to_hbm [thread:$0]  %s647, 128, %s644, %s630
        $region60: #{tpu_custom_call.1} parent=35 // pred_fallthru
          _
      $region36: #{tpu_custom_call.1} parent=5 // pred_fallthru
        _
      %p650 = scmp.le.s32.totalorder 2, %s19
      // Predicated region
      $region61: #{tpu_custom_call.1} parent=5 // pred_check
        %p651 = pneg %p650
      $region62: #{tpu_custom_call.1} parent=5 // pred_check_branch
        %653 = sbr.rel (%p651) target = $region64
      $region63: #{tpu_custom_call.1} parent=5 // pred_region
        %s654 = ssub.s32 %s19, 2
        // Predicated region
        $region65: #{tpu_custom_call.1} parent=63 // pred_check
          %p655 = pneg %p162
        $region66: #{tpu_custom_call.1} parent=63 // pred_check_branch
          %657 = sbr.rel (%p655) target = $region68
        $region67: #{tpu_custom_call.1} parent=63 // pred_region
          %s658 = sand.u32 %s147, 1
          %s659 = scalar_lea.sflag [#allocation5], %s658
          %s660 = sand.u32 %s147, 1
          %s661 = smul.addr %s660, 8
          %s662 = scalar_lea.vmem [#allocation12], %s661
          %663 = dma.done %s659, 128
        $region68: #{tpu_custom_call.1} parent=63 // pred_fallthru
          _
      $region64: #{tpu_custom_call.1} parent=5 // pred_fallthru
        _
    $region6: #{tpu_custom_call.1} parent=1 // loop_footer
      %s23 = sadd.s32 1, %s19
    $region7: #{tpu_custom_call.1} parent=1 // loop_footer_branch
      %18 = sbr.rel target = $region3
    $region8: #{tpu_custom_call.1} parent=1 // loop_exit
      _
    %664 = vsyncpa [#allocation4], 1
    %s665 = scalar_lea.sflag [#allocation4], 1
    %666 = vsyncpa %s665, 1
    %667 = vsyncpa [#allocation8], 1
    %668 = vsyncpa [#allocation5], 1
    %s669 = scalar_lea.sflag [#allocation5], 1
    %670 = vsyncpa %s669, 1
    %671 = vsyncpa [#allocation6], 1
    %s672 = scalar_lea.sflag [#allocation6], 1
    %673 = vsyncpa %s672, 1
    %674 = vsyncpa [#allocation11], 1

</llo_original>
